<compile_context>
chip_gen: v5e
topology: v5e:2x2
jax: 0.10.0
libtpu: 0.0.40
codegen_flags: <defaults>
</compile_context>

<pallas_src>
import math
import functools

import jax
import jax.numpy as jnp
from jax.experimental import pallas as pl
from jax.experimental.pallas import tpu as pltpu


# ----------------------------------------------------------------------------
# VMEM sizing helpers
# ----------------------------------------------------------------------------

def _vmem_budget_and_limit():
    """Generation-aware (budget_for_tiling, vmem_limit_bytes)."""
    phys = 64 * 1024 * 1024  # conservative default (v7x per-TensorCore VMEM)
    try:
        info = pltpu.get_tpu_info()
        phys = int(getattr(info, "vmem_capacity_bytes", phys))
    except Exception:
        pass
    # ~75% of physical for the scoped limit (≈48 MiB on v7x, ≈96 MiB on
    # v5e/v6e), and leave headroom inside that for Mosaic-internal scratch
    # when sizing tiles.
    limit = min(int(phys * 0.75), 100 * 1024 * 1024)
    budget = int(limit * 0.85)
    return budget, limit


def _pick_tq(nq, nk, d, dv, in_itemsize, attn_itemsize, budget, with_attn):
    """Largest query tile that divides Nq and fits the VMEM budget.

    Accounts for: double-buffered q/vl/o(/attn) tiles, resident K/V (double
    buffered), and the f32 softmax intermediates (scores, exp, weights) that
    are live simultaneously inside the kernel body.
    Returns (tq, fits): fits=False means even the smallest tile blows the
    budget (caller should prefer the flash path when the scores output is not
    needed).
    """
    kv_resident = 2 * nk * (d + dv) * in_itemsize  # K + V, double buffered
    for tq in (512, 256, 128, 64, 32, 16, 8):
        if nq % tq:
            continue
        per_step = 2 * tq * (d * in_itemsize      # q tile
                             + 4                  # valid_lens tile (int32)
                             + dv * in_itemsize)  # output tile
        if with_attn:
            per_step += 2 * tq * nk * attn_itemsize   # attention tile
        per_step += 3 * tq * nk * 4                   # f32 scores/exp/weights
        if kv_resident + per_step <= budget:
            return tq, True
    return (8 if nq % 8 == 0 else nq), False


def _pick_tk(nk):
    """Nk tile for the flash path: lane-friendly multiple of 128 if possible."""
    for tk in (1024, 512, 256, 128):
        if nk % tk == 0:
            return tk
    return nk


def _pick_flash_tq(nq, tk, d, dv, in_itemsize, budget):
    kv_tiles = 2 * 2 * tk * (d + dv) * in_itemsize   # double-buffered K,V tiles
    for tq in (512, 256, 128, 64, 32, 16, 8):
        if nq % tq:
            continue
        per = 2 * tq * (d * in_itemsize + 4 + dv * in_itemsize)  # q, vl, o
        per += tq * (dv + 2) * 4                                 # scratch (f32)
        per += 3 * tq * tk * 4                                   # s/p temporaries
        if kv_tiles + per <= budget:
            return tq
    return 8 if nq % 8 == 0 else nq


# ----------------------------------------------------------------------------
# Kernels
# ----------------------------------------------------------------------------

def _make_attn_kernel(scale, use_mask, write_attn):
    """Full-Nk path: K/V resident in VMEM across q-tiles of a batch."""

    def kernel(*refs):
        i = 0
        q_ref = refs[i]; i += 1
        k_ref = refs[i]; i += 1
        v_ref = refs[i]; i += 1
        vl_ref = None
        if use_mask:
            vl_ref = refs[i]; i += 1
        o_ref = refs[i]; i += 1
        attn_ref = refs[i] if write_attn else None

        # Fold 1/sqrt(d) into the small (TQ, D) Q tile (O(TQ*D) multiplies
        # instead of O(TQ*Nk)). Note: for bf16 inputs the scale is quantized
        # to bf16 here; torch on f32 scales the f32 logits.
        q = q_ref[0]
        q = q * jnp.asarray(scale, q.dtype)
        k = k_ref[0]
        v = v_ref[0]

        # Q @ K^T on the MXU in the input dtype, contracting the last dims
        # directly (NT form, no materialized k.T), f32 accumulation.
        scores = jax.lax.dot_general(
            q, k, (((1,), (1,)), ((), ())),
            preferred_element_type=jnp.float32)

        if use_mask:
            tq, nk = scores.shape
            col = jax.lax.broadcasted_iota(jnp.int32, (tq, nk), 1)
            scores = jnp.where(col < vl_ref[0], scores, jnp.float32(-1.0e6))

        # Numerically stable softmax. Exact reciprocal of the (TQ, 1) row-sum:
        # cheap, and keeps exported attention weights summing to 1.
        m = jnp.max(scores, axis=-1, keepdims=True)
        e = jnp.exp(scores - m)
        inv = 1.0 / jnp.sum(e, axis=-1, keepdims=True)
        p = e * inv

        if write_attn:
            attn_ref[0] = p.astype(attn_ref.dtype)
        # Second matmul also in the input dtype (cast p down once), f32 acc.
        o_ref[0] = jnp.dot(p.astype(v.dtype), v,
                           preferred_element_type=jnp.float32).astype(o_ref.dtype)

    return kernel


def _make_flash_kernel(scale, use_mask, tk):
    """Nk-tiled online-softmax path (no attention-scores output)."""

    def kernel(*refs):
        if use_mask:
            q_ref, k_ref, v_ref, vl_ref, o_ref, m_sc, l_sc, acc_sc = refs
        else:
            q_ref, k_ref, v_ref, o_ref, m_sc, l_sc, acc_sc = refs
        kt = pl.program_id(2)

        @pl.when(kt == 0)
        def _():
            m_sc[...] = jnp.full_like(m_sc, -jnp.inf)
            l_sc[...] = jnp.zeros_like(l_sc)
            acc_sc[...] = jnp.zeros_like(acc_sc)

        q = q_ref[0]
        q = q * jnp.asarray(scale, q.dtype)
        k = k_ref[0]
        v = v_ref[0]

        s = jax.lax.dot_general(
            q, k, (((1,), (1,)), ((), ())),
            preferred_element_type=jnp.float32)

        if use_mask:
            tq_, tk_ = s.shape
            col = kt * tk + jax.lax.broadcasted_iota(jnp.int32, (tq_, tk_), 1)
            s = jnp.where(col < vl_ref[0], s, jnp.float32(-1.0e6))

        m_prev = m_sc[...]
        m_new = jnp.maximum(m_prev, jnp.max(s, axis=-1, keepdims=True))
        alpha = jnp.exp(m_prev - m_new)
        p = jnp.exp(s - m_new)
        l_sc[...] = alpha * l_sc[...] + jnp.sum(p, axis=-1, keepdims=True)
        acc_sc[...] = alpha * acc_sc[...] + jax.lax.dot_general(
            p.astype(v.dtype), v, (((1,), (0,)), ((), ())),
            preferred_element_type=jnp.float32)
        m_sc[...] = m_new

        @pl.when(kt == pl.num_programs(2) - 1)
        def _():
            o_ref[0] = (acc_sc[...] * (1.0 / l_sc[...])).astype(o_ref.dtype)

    return kernel


# ----------------------------------------------------------------------------
# pallas_call builders
# ----------------------------------------------------------------------------

@functools.partial(jax.jit,
                   static_argnames=("use_mask", "want_attn", "tq", "vmem_limit"))
def _attention_full(queries, keys, values, vl, *, use_mask, want_attn, tq,
                    vmem_limit):
    B, Nq, D = queries.shape
    _, Nk, Dv = values.shape
    dtype = queries.dtype
    scale = 1.0 / math.sqrt(D)
    itemsize = jnp.dtype(dtype).itemsize

    in_specs = [
        pl.BlockSpec((1, tq, D), lambda b, qt: (b, qt, 0)),
        pl.BlockSpec((1, Nk, D), lambda b, qt: (b, 0, 0)),    # K resident per batch
        pl.BlockSpec((1, Nk, Dv), lambda b, qt: (b, 0, 0)),   # V resident per batch
    ]
    inputs = [queries, keys, values]
    if use_mask:
        in_specs.append(pl.BlockSpec((1, tq, 1), lambda b, qt: (b, qt, 0)))
        inputs.append(vl)

    out_shapes = [jax.ShapeDtypeStruct((B, Nq, Dv), dtype)]
    out_specs = [pl.BlockSpec((1, tq, Dv), lambda b, qt: (b, qt, 0))]
    if want_attn:
        out_shapes.append(jax.ShapeDtypeStruct((B, Nq, Nk), dtype))
        out_specs.append(pl.BlockSpec((1, tq, Nk), lambda b, qt: (b, qt, 0)))

    bytes_accessed = itemsize * (B * Nq * D + B * Nk * D + B * Nk * Dv
                                 + B * Nq * Dv)
    if want_attn:
        bytes_accessed += itemsize * B * Nq * Nk
    if use_mask:
        bytes_accessed += 4 * B * Nq

    # Megacore: shard the batch axis when possible; q-tiles of the same batch
    # share the resident K/V, so keep that axis serial unless B == 1.
    dim_sem = ("parallel", "arbitrary") if B >= 2 else ("parallel", "parallel")

    grid_spec = pltpu.PrefetchScalarGridSpec(
        num_scalar_prefetch=0,
        grid=(B, Nq // tq),
        in_specs=in_specs,
        out_specs=out_specs,
    )
    outs = pl.pallas_call(
        _make_attn_kernel(scale, use_mask, want_attn),
        out_shape=tuple(out_shapes),
        grid_spec=grid_spec,
        compiler_params=pltpu.CompilerParams(
            dimension_semantics=dim_sem,
            vmem_limit_bytes=vmem_limit),
        cost_estimate=pl.CostEstimate(
            flops=2 * B * Nq * Nk * (D + Dv),
            transcendentals=B * Nq * Nk,
            bytes_accessed=bytes_accessed),
    )(*inputs)
    return outs if want_attn else outs[0]


@functools.partial(jax.jit,
                   static_argnames=("use_mask", "tq", "tk", "vmem_limit"))
def _attention_flash(queries, keys, values, vl, *, use_mask, tq, tk,
                     vmem_limit):
    B, Nq, D = queries.shape
    _, Nk, Dv = values.shape
    dtype = queries.dtype
    scale = 1.0 / math.sqrt(D)
    itemsize = jnp.dtype(dtype).itemsize

    in_specs = [
        pl.BlockSpec((1, tq, D), lambda b, qt, kt: (b, qt, 0)),
        pl.BlockSpec((1, tk, D), lambda b, qt, kt: (b, kt, 0)),
        pl.BlockSpec((1, tk, Dv), lambda b, qt, kt: (b, kt, 0)),
    ]
    inputs = [queries, keys, values]
    if use_mask:
        in_specs.append(pl.BlockSpec((1, tq, 1), lambda b, qt, kt: (b, qt, 0)))
        inputs.append(vl)

    out_shapes = [jax.ShapeDtypeStruct((B, Nq, Dv), dtype)]
    out_specs = [pl.BlockSpec((1, tq, Dv), lambda b, qt, kt: (b, qt, 0))]

    n_qt = Nq // tq
    bytes_accessed = itemsize * (B * Nq * D + n_qt * B * Nk * (D + Dv)
                                 + B * Nq * Dv)
    if use_mask:
        bytes_accessed += 4 * B * Nq

    grid_spec = pltpu.PrefetchScalarGridSpec(
        num_scalar_prefetch=0,
        grid=(B, Nq // tq, Nk // tk),
        in_specs=in_specs,
        out_specs=out_specs,
        scratch_shapes=[pltpu.VMEM((tq, 1), jnp.float32),   # running max
                        pltpu.VMEM((tq, 1), jnp.float32),   # running denom
                        pltpu.VMEM((tq, Dv), jnp.float32)], # accumulator
    )
    outs = pl.pallas_call(
        _make_flash_kernel(scale, use_mask, tk),
        out_shape=tuple(out_shapes),
        grid_spec=grid_spec,
        compiler_params=pltpu.CompilerParams(
            dimension_semantics=("parallel", "parallel", "arbitrary"),
            vmem_limit_bytes=vmem_limit),
        cost_estimate=pl.CostEstimate(
            flops=2 * B * Nq * Nk * (D + Dv),
            transcendentals=B * Nq * Nk,
            bytes_accessed=bytes_accessed),
    )(*inputs)
    return outs[0]


# ----------------------------------------------------------------------------
# Public wrapper (mirrors DotProductAttention.forward)
# ----------------------------------------------------------------------------

def dot_product_attention(queries, keys, values, valid_lens=None, *,
                          return_attention_scores=True, _force_flash=False):
    """queries (B, Nq, D), keys (B, Nk, D), values (B, Nk, Dv).
    valid_lens: None, (B,) or (B, Nq) int.

    Returns (output, attention_scores) when return_attention_scores=True
    (the PyTorch module stores the scores on self.attention_scores), else
    only the output — which skips the O(B*Nq*Nk) score write-back.
    """
    queries = jnp.asarray(queries)
    keys = jnp.asarray(keys)
    values = jnp.asarray(values)
    B, Nq, D = queries.shape
    _, Nk, Dv = values.shape

    use_mask = valid_lens is not None
    if use_mask:
        vl = jnp.asarray(valid_lens)
        if vl.ndim == 1:
            # torch.repeat_interleave(valid_lens, Nq): same len for every query
            vl = jnp.broadcast_to(vl[:, None], (B, Nq))
        vl = vl.reshape(B, Nq).astype(jnp.int32).reshape(B, Nq, 1)
    else:
        vl = None

    budget, limit = _vmem_budget_and_limit()
    in_is = jnp.dtype(queries.dtype).itemsize
    attn_is = in_is  # scores carry the input dtype (matches torch)

    tq_full, full_fits = _pick_tq(Nq, Nk, D, Dv, in_is, attn_is, budget,
                                  with_attn=return_attention_scores)
    use_flash = (not return_attention_scores) and (_force_flash or not full_fits)

    if use_flash:
        tk = _pick_tk(Nk)
        tq = _pick_flash_tq(Nq, tk, D, Dv, in_is, budget)
        return _attention_flash(queries, keys, values, vl, use_mask=use_mask,
                                tq=tq, tk=tk, vmem_limit=limit)

    return _attention_full(queries, keys, values, vl, use_mask=use_mask,
                           want_attn=return_attention_scores, tq=tq_full,
                           vmem_limit=limit)


# ----------------------------------------------------------------------------
# Reference + self-test
# ----------------------------------------------------------------------------

def _reference(queries, keys, values, valid_lens=None):
    d = queries.shape[-1]
    qk = jnp.einsum("bqd,bkd->bqk", queries, keys,
                    precision=jax.lax.Precision.HIGHEST) / math.sqrt(d)
    if valid_lens is not None:
        B, Nq, Nk = qk.shape
        vl = jnp.asarray(valid_lens)
        if vl.ndim == 1:
            vl = jnp.broadcast_to(vl[:, None], (B, Nq))
        col = jnp.arange(Nk)[None, None, :]
        qk = jnp.where(col < vl[:, :, None], qk, -1.0e6)
    p = jax.nn.softmax(qk, axis=-1)
    o = jnp.einsum("bqk,bkd->bqd", p, values,
                   precision=jax.lax.Precision.HIGHEST)
    return o, p


if __name__ == "__main__":
    B, Nq, Nk, D, Dv = 2, 8, 8, 32, 32
    key = jax.random.PRNGKey(0)
    kq, kk, kv = jax.random.split(key, 3)
    queries = jax.random.normal(kq, (B, Nq, D), dtype=jnp.float32)
    keys = jax.random.normal(kk, (B, Nk, D), dtype=jnp.float32)
    values = jax.random.normal(kv, (B, Nk, Dv), dtype=jnp.float32)
    valid_lens = jnp.array([3, 6], dtype=jnp.int32)

    ref_out, ref_attn = _reference(queries, keys, values, valid_lens)
    ref_out2, _ = _reference(queries, keys, values, None)

    atol = rtol = 1e-3

    # 1) masked, with attention-scores output (module semantics)
    out, attn = dot_product_attention(queries, keys, values, valid_lens)
    jax.block_until_ready((out, attn))
    assert jnp.allclose(out, ref_out, atol=atol, rtol=rtol)
    assert jnp.allclose(attn, ref_attn, atol=atol, rtol=rtol)
    assert jnp.allclose(jnp.sum(attn, axis=-1), 1.0, atol=1e-3)

    # 2) unmasked, with scores
    out2, attn2 = dot_product_attention(queries, keys, values, None)
    jax.block_until_ready((out2, attn2))
    assert jnp.allclose(out2, ref_out2, atol=atol, rtol=rtol)
    assert jnp.allclose(jnp.sum(attn2, axis=-1), 1.0, atol=1e-3)

    # 3) masked, output only (skips the O(Nq*Nk) score write-back)
    out3 = dot_product_attention(queries, keys, values, valid_lens,
                                 return_attention_scores=False)
    jax.block_until_ready(out3)
    assert jnp.allclose(out3, ref_out, atol=atol, rtol=rtol)

    # 4) masked, output only, forced onto the Nk-tiled flash (long-context) path
    out4 = dot_product_attention(queries, keys, values, valid_lens,
                                 return_attention_scores=False,
                                 _force_flash=True)
    jax.block_until_ready(out4)
    assert jnp.allclose(out4, ref_out, atol=atol, rtol=rtol)

    # 5) unmasked flash path
    out5 = dot_product_attention(queries, keys, values, None,
                                 return_attention_scores=False,
                                 _force_flash=True)
    jax.block_until_ready(out5)
    assert jnp.allclose(out5, ref_out2, atol=atol, rtol=rtol)

    print("KERNEL_OK")
</pallas_src>

<mosaic_0001>
module attributes {stable_mosaic.version = 11 : i64} {
  func.func @kernel(%arg0: i32, %arg1: i32, %arg2: memref<1x8x32xf32, #tpu.memory_space<vmem>>, %arg3: memref<1x8x32xf32, #tpu.memory_space<vmem>>, %arg4: memref<1x8x32xf32, #tpu.memory_space<vmem>>, %arg5: memref<1x8x1xi32, #tpu.memory_space<vmem>>, %arg6: memref<1x8x32xf32, #tpu.memory_space<vmem>>, %arg7: memref<1x8x8xf32, #tpu.memory_space<vmem>>) attributes {dimension_semantics = [#tpu.dimension_semantics<parallel>, #tpu.dimension_semantics<arbitrary>], iteration_bounds = array<i64: 2, 1>, scalar_prefetch = 0 : i64, scratch_operands = 0 : i64, tpu.core_type = #tpu.core_type<tc>, window_params = [{transform_indices = @transform_0, window_bounds = array<i64: 1, 8, 32>}, {transform_indices = @transform_1, window_bounds = array<i64: 1, 8, 32>}, {transform_indices = @transform_2, window_bounds = array<i64: 1, 8, 32>}, {transform_indices = @transform_3, window_bounds = array<i64: 1, 8, 1>}, {transform_indices = @transform_4, window_bounds = array<i64: 1, 8, 32>}, {transform_indices = @transform_5, window_bounds = array<i64: 1, 8, 8>}]} {
    %c0 = arith.constant 0 : index
    %c0_0 = arith.constant 0 : index
    %c0_1 = arith.constant 0 : index
    %0 = vector.load %arg2[%c0, %c0_0, %c0_1] : memref<1x8x32xf32, #tpu.memory_space<vmem>>, vector<1x8x32xf32>
    %1 = vector.shape_cast %0 : vector<1x8x32xf32> to vector<8x32xf32>
    %cst = arith.constant 0.176776692 : f32
    %2 = vector.broadcast %cst : f32 to vector<8x32xf32>
    %3 = arith.mulf %1, %2 : vector<8x32xf32>
    %c0_2 = arith.constant 0 : index
    %c0_3 = arith.constant 0 : index
    %c0_4 = arith.constant 0 : index
    %4 = vector.load %arg3[%c0_2, %c0_3, %c0_4] : memref<1x8x32xf32, #tpu.memory_space<vmem>>, vector<1x8x32xf32>
    %5 = vector.shape_cast %4 : vector<1x8x32xf32> to vector<8x32xf32>
    %c0_5 = arith.constant 0 : index
    %c0_6 = arith.constant 0 : index
    %c0_7 = arith.constant 0 : index
    %6 = vector.load %arg4[%c0_5, %c0_6, %c0_7] : memref<1x8x32xf32, #tpu.memory_space<vmem>>, vector<1x8x32xf32>
    %7 = vector.shape_cast %6 : vector<1x8x32xf32> to vector<8x32xf32>
    %cst_8 = arith.constant dense<0.000000e+00> : vector<8x8xf32>
    %8 = tpu.matmul %3, %5, %cst_8 {dimension_numbers = #tpu.dot_dimension_numbers<[1], [1], [0], [0], [0, 0, 1, 0], [], []>} : vector<8x32xf32>, vector<8x32xf32>, vector<8x8xf32> -> vector<8x8xf32>
    %9 = tpu.iota {dimensions = array<i32: 1>} : vector<8x8xi32>
    %c0_9 = arith.constant 0 : index
    %c0_10 = arith.constant 0 : index
    %c0_11 = arith.constant 0 : index
    %10 = vector.load %arg5[%c0_9, %c0_10, %c0_11] : memref<1x8x1xi32, #tpu.memory_space<vmem>>, vector<1x8x1xi32>
    %11 = vector.shape_cast %10 : vector<1x8x1xi32> to vector<8x1xi32>
    %12 = vector.broadcast %11 : vector<8x1xi32> to vector<8x8xi32>
    %13 = arith.cmpi slt, %9, %12 : vector<8x8xi32>
    %cst_12 = arith.constant -1.000000e+06 : f32
    %14 = vector.broadcast %cst_12 : f32 to vector<8x8xf32>
    %15 = arith.select %13, %8, %14 : vector<8x8xi1>, vector<8x8xf32>
    %cst_13 = arith.constant dense<0xFF800000> : vector<8xf32>
    %16 = vector.multi_reduction <maximumf>, %15, %cst_13 [1] : vector<8x8xf32> to vector<8xf32>
    %17 = vector.shape_cast %16 : vector<8xf32> to vector<8x1xf32>
    %18 = vector.broadcast %17 : vector<8x1xf32> to vector<8x8xf32>
    %19 = arith.subf %15, %18 : vector<8x8xf32>
    %20 = math.exp %19 : vector<8x8xf32>
    %cst_14 = arith.constant dense<0.000000e+00> : vector<8xf32>
    %21 = vector.multi_reduction <add>, %20, %cst_14 [1] : vector<8x8xf32> to vector<8xf32>
    %22 = vector.shape_cast %21 : vector<8xf32> to vector<8x1xf32>
    %cst_15 = arith.constant 1.000000e+00 : f32
    %23 = vector.broadcast %cst_15 : f32 to vector<8x1xf32>
    %24 = arith.divf %23, %22 : vector<8x1xf32>
    %25 = vector.broadcast %24 : vector<8x1xf32> to vector<8x8xf32>
    %26 = arith.mulf %20, %25 : vector<8x8xf32>
    %c0_16 = arith.constant 0 : index
    %c0_17 = arith.constant 0 : index
    %c0_18 = arith.constant 0 : index
    %27 = vector.load %arg7[%c0_16, %c0_17, %c0_18] : memref<1x8x8xf32, #tpu.memory_space<vmem>>, vector<1x8x8xf32>
    %28 = vector.shape_cast %27 : vector<1x8x8xf32> to vector<8x8xf32>
    %29 = vector.shape_cast %26 : vector<8x8xf32> to vector<1x8x8xf32>
    tpu.vector_store %arg7[%c0_16, %c0_17, %c0_18], %29 {strides = array<i32>} : memref<1x8x8xf32, #tpu.memory_space<vmem>>, vector<1x8x8xf32>,
    %cst_19 = arith.constant dense<0.000000e+00> : vector<8x32xf32>
    %30 = tpu.matmul %26, %7, %cst_19 {dimension_numbers = #tpu.dot_dimension_numbers<[1], [0], [0], [1], [0, 0, 1, 1], [], []>} : vector<8x8xf32>, vector<8x32xf32>, vector<8x32xf32> -> vector<8x32xf32>
    %c0_20 = arith.constant 0 : index
    %c0_21 = arith.constant 0 : index
    %c0_22 = arith.constant 0 : index
    %31 = vector.load %arg6[%c0_20, %c0_21, %c0_22] : memref<1x8x32xf32, #tpu.memory_space<vmem>>, vector<1x8x32xf32>
    %32 = vector.shape_cast %31 : vector<1x8x32xf32> to vector<8x32xf32>
    %33 = vector.shape_cast %30 : vector<8x32xf32> to vector<1x8x32xf32>
    tpu.vector_store %arg6[%c0_20, %c0_21, %c0_22], %33 {strides = array<i32>} : memref<1x8x32xf32, #tpu.memory_space<vmem>>, vector<1x8x32xf32>,
    return
  }
  func.func @transform_0(%arg0: i32, %arg1: i32) -> (i32, i32, i32) {
    %c0_i32 = arith.constant 0 : i32
    %c0_i32_0 = arith.constant 0 : i32
    return %arg0, %arg1, %c0_i32 : i32, i32, i32
  }
  func.func @transform_1(%arg0: i32, %arg1: i32) -> (i32, i32, i32) {
    %c0_i32 = arith.constant 0 : i32
    %c0_i32_0 = arith.constant 0 : i32
    %c0_i32_1 = arith.constant 0 : i32
    return %arg0, %c0_i32, %c0_i32_0 : i32, i32, i32
  }
  func.func @transform_2(%arg0: i32, %arg1: i32) -> (i32, i32, i32) {
    %c0_i32 = arith.constant 0 : i32
    %c0_i32_0 = arith.constant 0 : i32
    %c0_i32_1 = arith.constant 0 : i32
    return %arg0, %c0_i32, %c0_i32_0 : i32, i32, i32
  }
  func.func @transform_3(%arg0: i32, %arg1: i32) -> (i32, i32, i32) {
    %c0_i32 = arith.constant 0 : i32
    %c0_i32_0 = arith.constant 0 : i32
    return %arg0, %arg1, %c0_i32 : i32, i32, i32
  }
  func.func @transform_4(%arg0: i32, %arg1: i32) -> (i32, i32, i32) {
    %c0_i32 = arith.constant 0 : i32
    %c0_i32_0 = arith.constant 0 : i32
    return %arg0, %arg1, %c0_i32 : i32, i32, i32
  }
  func.func @transform_5(%arg0: i32, %arg1: i32) -> (i32, i32, i32) {
    %c0_i32 = arith.constant 0 : i32
    %c0_i32_0 = arith.constant 0 : i32
    return %arg0, %arg1, %c0_i32 : i32, i32, i32
  }
}

</mosaic_0001>

<llo_original>
// kernel: _attention_full.1
$region0: #{_attention_full.1}
  #allocation0 [shape = 'u32[]', space=smem, size = 0x4, offset = 0x4, fixed_abs, tag = 'smem constant byte address 0x4 - core index']
  #allocation1 [shape = 'u32[72,128]{1,0:T(1,128)}', space=vmem, size = 0x9000, scoped, tag = 'internal scratch']
  %s0 = inlined_call_operand.vmem [shape: f32[2,8,32], index: 0, kind: input, shape index: {}]
  %s1 = inlined_call_operand.hbm [shape: f32[2,8,32], index: 1, kind: input, shape index: {}]
  %s2 = inlined_call_operand.hbm [shape: f32[2,8,32], index: 2, kind: input, shape index: {}]
  %s3 = inlined_call_operand.vmem [shape: s32[2,8,1], index: 3, kind: input, shape index: {}]
  %s4 = inlined_call_operand.hbm [shape: f32[2,8,32], index: 4, kind: output, shape index: {0}]
  %s5 = inlined_call_operand.hbm [shape: f32[2,8,8], index: 5, kind: output, shape index: {1}]
  %6 = xla_tuple %s4, %s5
  %s7 = sld [smem:[#allocation0]]
  $region65: #{_attention_full.1} parent=0
    _
  %s9 = ssub.s32 1, %s7
  %s10 = scalar_select 0, %s9, %s7
  $region1: #{_attention_full.1} parent=0
    #allocation2 [shape = 'u8[8192]{0}', space=vmem, size = 0x2000, scoped, tag = 'input window, operand 1']
    #allocation3 [shape = 's32[2]{0}', space=sflag, size = 0x8, scoped, tag = 'scoped memory for _attention_full.1']
    #allocation4 [shape = 's32[2]{0}', space=sflag, size = 0x8, scoped, tag = 'scoped memory for _attention_full.1']
    #allocation5 [shape = 'u8[8192]{0}', space=vmem, size = 0x2000, scoped, tag = 'input window, operand 2']
    #allocation6 [shape = 's32[2]{0}', space=sflag, size = 0x8, scoped, tag = 'scoped memory for _attention_full.1']
    #allocation7 [shape = 'u8[8192]{0}', space=vmem, size = 0x2000, scoped, tag = 'output window, operand 0']
    #allocation8 [shape = 'u8[8192]{0}', space=vmem, size = 0x2000, scoped, tag = 'output window, operand 1']
    #allocation9 [shape = 's32[2]{0}', space=sflag, size = 0x8, scoped, tag = 'scoped memory for _attention_full.1']
    %11 = vsyncpa [#allocation3], 0
    %s12 = scalar_lea.sflag [#allocation3], 1
    %13 = vsyncpa %s12, 0
    %14 = vsyncpa [#allocation6], 0
    %s15 = scalar_lea.sflag [#allocation6], 1
    %16 = vsyncpa %s15, 0
    %17 = vsyncpa [#allocation4], 0
    %s18 = scalar_lea.sflag [#allocation4], 1
    %19 = vsyncpa %s18, 0
    %20 = vsyncpa [#allocation9], 0
    %s21 = scalar_lea.sflag [#allocation9], 1
    %22 = vsyncpa %s21, 0
    loop: start=0, step=1, limit=4
    $region2: #{_attention_full.1} parent=1 // loop_pre_header
      _
    $region3: #{_attention_full.1} parent=1 // loop_header
      %s24 = sphi 0, %s28
      %p25 = scmp.ge.s32.totalorder %s24, 4
      %s31 = sphi 0, %s43
      %s32 = sphi 0, %s39
      %s33 = sphi 0, %s31
      %s34 = sphi 0, %s32
      %s35 = sphi 0, %s33
      %s36 = sphi 0, %s34
      %s48 = sphi 0, %s50
      %s51 = sphi 0, %s48
      %s52 = sphi 0, %s51
      %s68 = sphi 0, %s52
      %s74 = sphi 0, %s76
      %s77 = sphi 0, %s74
      %s78 = sphi 0, %s77
      %s94 = sphi 0, %s78
      %s100 = sphi 0, %s102
      %s103 = sphi 0, %s100
      %s104 = sphi 0, %s103
      %s120 = sphi 0, %s104
      %s128 = sphi 0, %s130
      %s131 = sphi 0, %s128
      %s132 = sphi 0, %s131
      %s148 = sphi 0, %s132
      %s156 = sphi 0, %s158
      %s159 = sphi 0, %s156
      %s160 = sphi 0, %s159
      %s176 = sphi 0, %s160
      %s184 = sphi 0, %s186
      %s187 = sphi 0, %s184
      %s188 = sphi 0, %s187
      %s204 = sphi 0, %s188
    $region4: #{_attention_full.1} parent=1 // loop_header_branch
      %27 = sbr.rel (%p25) target = $region8
    $region5: #{_attention_full.1} parent=1 // loop_body
      %s29 = ssub.s32 %s24, 1
      %s30 = ssub.s32 %s24, 2
      %s37 = sadd.s32 1, %s32
      %p38 = scmp.ge.s32.totalorder %s37, 1
      %s39 = scalar_select %p38, 0, %s37
      %s40 = sadd.s32 1, %s31
      %s41 = scalar_select %p38, %s40, %s31
      %p42 = scmp.ge.s32.totalorder %s41, 2
      %s43 = scalar_select %p42, 0, %s41
      %s44 = ssub.s32 %s31, %s43
      %s45 = ssub.s32 %s32, %s39
      %s46 = sor.u32 %s44, %s45
      %p47 = scmp.eq.s32.totalorder %s46, 0
      %s49 = sadd.s32 %s48, 1
      %s50 = scalar_select %p47, %s48, %s49
      %p53 = pneg %p47
      %p54 = scmp.eq.s32.totalorder %s24, 1
      %p55 = por %p53, %p54
      %p56 = scmp.ne.s32.totalorder %s48, %s51
      %p57 = scmp.eq.s32.totalorder %s24, 0
      %p58 = por %p56, %p57
      %p59 = scmp.ne.s32.totalorder %s48, %s51
      %p60 = scmp.eq.s32.totalorder %s29, 1
      %p61 = por %p59, %p60
      %p62 = scmp.ne.s32.totalorder %s51, %s52
      %p63 = scmp.eq.s32.totalorder %s29, 0
      %p64 = por %p62, %p63
      %p65 = scmp.ne.s32.totalorder %s51, %s52
      %p66 = scmp.eq.s32.totalorder %s30, 1
      %p67 = por %p65, %p66
      %p69 = scmp.ne.s32.totalorder %s52, %s68
      %p70 = scmp.eq.s32.totalorder %s30, 0
      %p71 = por %p69, %p70
      %s72 = ssub.s32 %s31, %s43
      %p73 = scmp.eq.s32.totalorder %s72, 0
      %s75 = sadd.s32 %s74, 1
      %s76 = scalar_select %p73, %s74, %s75
      %p79 = pneg %p73
      %p80 = scmp.eq.s32.totalorder %s24, 1
      %p81 = por %p79, %p80
      %p82 = scmp.ne.s32.totalorder %s74, %s77
      %p83 = scmp.eq.s32.totalorder %s24, 0
      %p84 = por %p82, %p83
      %p85 = scmp.ne.s32.totalorder %s74, %s77
      %p86 = scmp.eq.s32.totalorder %s29, 1
      %p87 = por %p85, %p86
      %p88 = scmp.ne.s32.totalorder %s77, %s78
      %p89 = scmp.eq.s32.totalorder %s29, 0
      %p90 = por %p88, %p89
      %p91 = scmp.ne.s32.totalorder %s77, %s78
      %p92 = scmp.eq.s32.totalorder %s30, 1
      %p93 = por %p91, %p92
      %p95 = scmp.ne.s32.totalorder %s78, %s94
      %p96 = scmp.eq.s32.totalorder %s30, 0
      %p97 = por %p95, %p96
      %s98 = ssub.s32 %s31, %s43
      %p99 = scmp.eq.s32.totalorder %s98, 0
      %s101 = sadd.s32 %s100, 1
      %s102 = scalar_select %p99, %s100, %s101
      %p105 = pneg %p99
      %p106 = scmp.eq.s32.totalorder %s24, 1
      %p107 = por %p105, %p106
      %p108 = scmp.ne.s32.totalorder %s100, %s103
      %p109 = scmp.eq.s32.totalorder %s24, 0
      %p110 = por %p108, %p109
      %p111 = scmp.ne.s32.totalorder %s100, %s103
      %p112 = scmp.eq.s32.totalorder %s29, 1
      %p113 = por %p111, %p112
      %p114 = scmp.ne.s32.totalorder %s103, %s104
      %p115 = scmp.eq.s32.totalorder %s29, 0
      %p116 = por %p114, %p115
      %p117 = scmp.ne.s32.totalorder %s103, %s104
      %p118 = scmp.eq.s32.totalorder %s30, 1
      %p119 = por %p117, %p118
      %p121 = scmp.ne.s32.totalorder %s104, %s120
      %p122 = scmp.eq.s32.totalorder %s30, 0
      %p123 = por %p121, %p122
      %s124 = ssub.s32 %s31, %s43
      %s125 = ssub.s32 %s32, %s39
      %s126 = sor.u32 %s124, %s125
      %p127 = scmp.eq.s32.totalorder %s126, 0
      %s129 = sadd.s32 %s128, 1
      %s130 = scalar_select %p127, %s128, %s129
      %p133 = pneg %p127
      %p134 = scmp.eq.s32.totalorder %s24, 1
      %p135 = por %p133, %p134
      %p136 = scmp.ne.s32.totalorder %s128, %s131
      %p137 = scmp.eq.s32.totalorder %s24, 0
      %p138 = por %p136, %p137
      %p139 = scmp.ne.s32.totalorder %s128, %s131
      %p140 = scmp.eq.s32.totalorder %s29, 1
      %p141 = por %p139, %p140
      %p142 = scmp.ne.s32.totalorder %s131, %s132
      %p143 = scmp.eq.s32.totalorder %s29, 0
      %p144 = por %p142, %p143
      %p145 = scmp.ne.s32.totalorder %s131, %s132
      %p146 = scmp.eq.s32.totalorder %s30, 1
      %p147 = por %p145, %p146
      %p149 = scmp.ne.s32.totalorder %s132, %s148
      %p150 = scmp.eq.s32.totalorder %s30, 0
      %p151 = por %p149, %p150
      %s152 = ssub.s32 %s31, %s43
      %s153 = ssub.s32 %s32, %s39
      %s154 = sor.u32 %s152, %s153
      %p155 = scmp.eq.s32.totalorder %s154, 0
      %s157 = sadd.s32 %s156, 1
      %s158 = scalar_select %p155, %s156, %s157
      %p161 = pneg %p155
      %p162 = scmp.eq.s32.totalorder %s24, 1
      %p163 = por %p161, %p162
      %p164 = scmp.ne.s32.totalorder %s156, %s159
      %p165 = scmp.eq.s32.totalorder %s24, 0
      %p166 = por %p164, %p165
      %p167 = scmp.ne.s32.totalorder %s156, %s159
      %p168 = scmp.eq.s32.totalorder %s29, 1
      %p169 = por %p167, %p168
      %p170 = scmp.ne.s32.totalorder %s159, %s160
      %p171 = scmp.eq.s32.totalorder %s29, 0
      %p172 = por %p170, %p171
      %p173 = scmp.ne.s32.totalorder %s159, %s160
      %p174 = scmp.eq.s32.totalorder %s30, 1
      %p175 = por %p173, %p174
      %p177 = scmp.ne.s32.totalorder %s160, %s176
      %p178 = scmp.eq.s32.totalorder %s30, 0
      %p179 = por %p177, %p178
      %s180 = ssub.s32 %s31, %s43
      %s181 = ssub.s32 %s32, %s39
      %s182 = sor.u32 %s180, %s181
      %p183 = scmp.eq.s32.totalorder %s182, 0
      %s185 = sadd.s32 %s184, 1
      %s186 = scalar_select %p183, %s184, %s185
      %p189 = pneg %p183
      %p190 = scmp.eq.s32.totalorder %s24, 1
      %p191 = por %p189, %p190
      %p192 = scmp.ne.s32.totalorder %s184, %s187
      %p193 = scmp.eq.s32.totalorder %s24, 0
      %p194 = por %p192, %p193
      %p195 = scmp.ne.s32.totalorder %s184, %s187
      %p196 = scmp.eq.s32.totalorder %s29, 1
      %p197 = por %p195, %p196
      %p198 = scmp.ne.s32.totalorder %s187, %s188
      %p199 = scmp.eq.s32.totalorder %s29, 0
      %p200 = por %p198, %p199
      %p201 = scmp.ne.s32.totalorder %s187, %s188
      %p202 = scmp.eq.s32.totalorder %s30, 1
      %p203 = por %p201, %p202
      %p205 = scmp.ne.s32.totalorder %s188, %s204
      %p206 = scmp.eq.s32.totalorder %s30, 0
      %p207 = por %p205, %p206
      %p208 = scmp.le.s32.totalorder 1, %s24
      %p209 = scmp.lt.s32.totalorder %s24, 3
      %p210 = pnand %p208, %p209
      %p211 = pneg %p210
      // Predicated region
      $region9: #{_attention_full.1} parent=5 // pred_check
        _
      $region10: #{_attention_full.1} parent=5 // pred_check_branch
        %213 = sbr.rel (%p210) target = $region12
      $region11: #{_attention_full.1} parent=5 // pred_region
        %s214 = ssub.s32 %s24, 1
      $region12: #{_attention_full.1} parent=5 // pred_fallthru
        _
      %p215 = scmp.lt.s32.totalorder %s24, 2
      // Predicated region
      $region13: #{_attention_full.1} parent=5 // pred_check
        %p216 = pneg %p215
      $region14: #{_attention_full.1} parent=5 // pred_check_branch
        %218 = sbr.rel (%p216) target = $region16
      $region15: #{_attention_full.1} parent=5 // pred_region
        // Predicated region
        $region17: #{_attention_full.1} parent=15 // pred_check
          %p219 = pneg %p58
        $region18: #{_attention_full.1} parent=15 // pred_check_branch
          %221 = sbr.rel (%p219) target = $region20
        $region19: #{_attention_full.1} parent=15 // pred_region
          %p222 = scmp.lt.s32.totalorder %s31, 1
          %s223 = scalar_select %p222, %s31, 1
          %p224 = scmp.lt.s32.totalorder %s32, 0
          %s225 = scalar_select %p224, %s32, 0
          %s226 = sadd.s32 %s225, %s223
          %s227 = smul.addr %s226, 8
          %s228 = scalar_lea.vmem %s0, %s227
        $region20: #{_attention_full.1} parent=15 // pred_fallthru
          _
        // Predicated region
        $region21: #{_attention_full.1} parent=15 // pred_check
          %p229 = pneg %p84
        $region22: #{_attention_full.1} parent=15 // pred_check_branch
          %231 = sbr.rel (%p229) target = $region24
        $region23: #{_attention_full.1} parent=15 // pred_region
          %s232 = sand.u32 %s74, 1
          %s233 = scalar_lea.sflag [#allocation3], %s232
          %s234 = sand.u32 %s74, 1
          %s235 = smul.addr %s234, 8
          %s236 = scalar_lea.vmem [#allocation2], %s235
          %238 = vsyncadd %s233, 0
          %s239 = smul.addr %s31, 8
          %s240 = scalar_lea.hbm %s1, %s239
          %s242 = sshll.u32 %s240, 4
          %s243 = int_to_ptr.hbm [resolvable:$true] %s242
          %s244 = sshll.u32 %s236, 4
          %s245 = int_to_ptr.vmem [resolvable:$true] %s244
          %247 = dma.hbm_to_vmem [thread:$0]  %s243, 128, %s245, %s233
        $region24: #{_attention_full.1} parent=15 // pred_fallthru
          _
        // Predicated region
        $region25: #{_attention_full.1} parent=15 // pred_check
          %p248 = pneg %p110
        $region26: #{_attention_full.1} parent=15 // pred_check_branch
          %250 = sbr.rel (%p248) target = $region28
        $region27: #{_attention_full.1} parent=15 // pred_region
          %s251 = sand.u32 %s100, 1
          %s252 = scalar_lea.sflag [#allocation6], %s251
          %s253 = sand.u32 %s100, 1
          %s254 = smul.addr %s253, 8
          %s255 = scalar_lea.vmem [#allocation5], %s254
          %257 = vsyncadd %s252, 0
          %s258 = smul.addr %s31, 8
          %s259 = scalar_lea.hbm %s2, %s258
          %s261 = sshll.u32 %s259, 4
          %s262 = int_to_ptr.hbm [resolvable:$true] %s261
          %s263 = sshll.u32 %s255, 4
          %s264 = int_to_ptr.vmem [resolvable:$true] %s263
          %266 = dma.hbm_to_vmem [thread:$0]  %s262, 128, %s264, %s252
        $region28: #{_attention_full.1} parent=15 // pred_fallthru
          _
        // Predicated region
        $region29: #{_attention_full.1} parent=15 // pred_check
          %p267 = pneg %p138
        $region30: #{_attention_full.1} parent=15 // pred_check_branch
          %269 = sbr.rel (%p267) target = $region32
        $region31: #{_attention_full.1} parent=15 // pred_region
          %p270 = scmp.lt.s32.totalorder %s31, 1
          %s271 = scalar_select %p270, %s31, 1
          %p272 = scmp.lt.s32.totalorder %s32, 0
          %s273 = scalar_select %p272, %s32, 0
          %s274 = sadd.s32 %s273, %s271
          %s275 = smul.addr %s274, 8
          %s276 = scalar_lea.vmem %s3, %s275
        $region32: #{_attention_full.1} parent=15 // pred_fallthru
          _
      $region16: #{_attention_full.1} parent=5 // pred_fallthru
        _
      %p277 = scmp.le.s32.totalorder 1, %s24
      %p278 = scmp.lt.s32.totalorder %s24, 3
      %p279 = pnand %p277, %p278
      %p280 = pneg %p279
      // Predicated region
      $region33: #{_attention_full.1} parent=5 // pred_check
        _
      $region34: #{_attention_full.1} parent=5 // pred_check_branch
        %282 = sbr.rel (%p279) target = $region36
      $region35: #{_attention_full.1} parent=5 // pred_region
        %s283 = ssub.s32 %s24, 1
        %s284 = sand.u32 %s77, 1
        %s285 = scalar_lea.sflag [#allocation3], %s284
        %s286 = sand.u32 %s77, 1
        %s287 = smul.addr %s286, 8
        %s288 = scalar_lea.vmem [#allocation2], %s287
        // Predicated region
        $region37: #{_attention_full.1} parent=35 // pred_check
          %p289 = pneg %p90
        $region38: #{_attention_full.1} parent=35 // pred_check_branch
          %291 = sbr.rel (%p289) target = $region40
        $region39: #{_attention_full.1} parent=35 // pred_region
          %293 = dma.done %s285, 128
        $region40: #{_attention_full.1} parent=35 // pred_fallthru
          _
        %s294 = sand.u32 %s103, 1
        %s295 = scalar_lea.sflag [#allocation6], %s294
        %s296 = sand.u32 %s103, 1
        %s297 = smul.addr %s296, 8
        %s298 = scalar_lea.vmem [#allocation5], %s297
        // Predicated region
        $region41: #{_attention_full.1} parent=35 // pred_check
          %p299 = pneg %p116
        $region42: #{_attention_full.1} parent=35 // pred_check_branch
          %301 = sbr.rel (%p299) target = $region44
        $region43: #{_attention_full.1} parent=35 // pred_region
          %303 = dma.done %s295, 128
        $region44: #{_attention_full.1} parent=35 // pred_fallthru
          _
        %p304 = scmp.lt.s32.totalorder %s33, 1
        %s305 = scalar_select %p304, %s33, 1
        %p306 = scmp.lt.s32.totalorder %s34, 0
        %s307 = scalar_select %p306, %s34, 0
        %s308 = sadd.s32 %s307, %s305
        %s309 = smul.addr %s308, 8
        %s310 = scalar_lea.vmem %s0, %s309
        %p311 = pneg %p64
        %p312 = pneg %p61
        %s313 = sand.u32 %s77, 1
        %s314 = scalar_lea.sflag [#allocation3], %s313
        %s315 = sand.u32 %s77, 1
        %s316 = smul.addr %s315, 8
        %s317 = scalar_lea.vmem [#allocation2], %s316
        %p318 = pneg %p90
        %p319 = pneg %p87
        %s320 = sand.u32 %s103, 1
        %s321 = scalar_lea.sflag [#allocation6], %s320
        %s322 = sand.u32 %s103, 1
        %s323 = smul.addr %s322, 8
        %s324 = scalar_lea.vmem [#allocation5], %s323
        %p325 = pneg %p116
        %p326 = pneg %p113
        %p327 = scmp.lt.s32.totalorder %s33, 1
        %s328 = scalar_select %p327, %s33, 1
        %p329 = scmp.lt.s32.totalorder %s34, 0
        %s330 = scalar_select %p329, %s34, 0
        %s331 = sadd.s32 %s330, %s328
        %s332 = smul.addr %s331, 8
        %s333 = scalar_lea.vmem %s3, %s332
        %p334 = pneg %p144
        %p335 = pneg %p141
        %p336 = pneg %p172
        %p337 = pneg %p169
        %s338 = sand.u32 %s159, 1
        %s339 = scalar_lea.sflag [#allocation4], %s338
        %s340 = sand.u32 %s159, 1
        %s341 = smul.addr %s340, 8
        %s342 = scalar_lea.vmem [#allocation7], %s341
        %p343 = pneg %p200
        %p344 = pneg %p197
        %s345 = sand.u32 %s187, 1
        %s346 = scalar_lea.sflag [#allocation9], %s345
        %s347 = sand.u32 %s187, 1
        %s348 = smul.addr %s347, 8
        %s349 = scalar_lea.vmem [#allocation8], %s348
        %p350 = scmp.lt.s32.totalorder %s33, 1
        %s351 = scalar_select %p350, %s33, 1
        %p352 = scmp.lt.s32.totalorder %s34, 0
        %s353 = scalar_select %p352, %s34, 0
        %s354 = sadd.s32 %s353, %s351
        %s355 = smul.addr %s354, 8
        %s356 = scalar_lea.vmem %s0, %s355
        %p357 = scmp.lt.s32.totalorder %s33, 1
        %s358 = scalar_select %p357, %s33, 1
        %p359 = scmp.lt.s32.totalorder %s34, 0
        %s360 = scalar_select %p359, %s34, 0
        %s361 = sadd.s32 %s360, %s358
        %s362 = smul.addr %s361, 8
        %s363 = scalar_lea.vmem %s3, %s362
        %v364 = vld [vmem:[%s356] sm:$0xff]
        %v365 = vmul.f32 %v364, 0.17677669
        %v366 = vld [vmem:[%s288] sm:$0xff]
        %v367 = vld [vmem:[%s298] sm:$0xff]
        %vm368 = vcmask 261120
        %v370 = vsel %vm368, %v365, 0
        %v373 = vsel %vm368, %v366, 0
        %375 = vmatpush.xpose.msra.mxu0 0.0
        %376 = vmatpush.xpose.msra.mxu0 0.0
        %377 = vmatpush.xpose.msra.mxu0 0.0
        %378 = vmatpush.xpose.msra.mxu0 0.0
        %379 = vmatpush.xpose.msra.mxu0 0.0
        %380 = vmatpush.xpose.msra.mxu0 0.0
        %381 = vmatpush.xpose.msra.mxu0 0.0
        %382 = vmatpush.xpose.msra.mxu0 0.0
        %383 = vmatpush.xpose.msra.mxu0 0.0
        %384 = vmatpush.xpose.msra.mxu0 0.0
        %385 = vmatpush.xpose.msra.mxu0 0.0
        %386 = vmatpush.xpose.msra.mxu0 0.0
        %387 = vmatpush.xpose.msra.mxu0 0.0
        %388 = vmatpush.xpose.msra.mxu0 0.0
        %389 = vmatpush.xpose.msra.mxu0 0.0
        %390 = vmatpush.xpose.msra.mxu0 %v373
        %391 = vmatmul.f32.gmra.mxu0 %v370
        %v392 = vpop.f32.mrf.mxu0
        %v393 = vadd.f32 0.0, %v392
        %394 = vdwg.mxu0
        %v395 = vlaneseq
        %v396 = vand.u32 %v395, 127
        %v397 = vld [vmem:[%s363] sm:$0xff]
        %398 = vset.pattern.permute.xlu0 0
        %399 = vperm.xlu0 %398, %v397
        %v400 = vpop.permute.xlu0 %399
        %vm401 = vcmp.lt.s32.totalorder %v396, %v400
        %v402 = vsel %vm401, %v393, -1000000.0
        %vm403 = vcmask 64512
        %v404 = vsel %vm403, %v402, -inf
        %405 = vmax.xlane.f32.xlu0 %v404
        %v406 = vpop.xlane.xlu0 %405
        %v407 = vsub.f32 %v402, %v406
        %v408 = vmul.f32 %v407, 1.442695
        %v409 = vpow.pop %v408
        %v410 = vsel %vm403, %v409, 0.0
        %411 = vadd.xlane.f32.xlu0 %v410
        %v412 = vpop.xlane.xlu0 %411
        %v413 = vrcp.pop %v412
        %v414 = vmul.f32 %v412, %v413
        %v415 = vsub.f32 1.0, %v414
        %v416 = vmul.f32 %v413, %v415
        %v417 = vadd.f32 %v413, %v416
        %vm418 = vweird.f32 %v412
        %vm419 = vweird.f32 %v413
        %vm420 = vmor %vm418, %vm419
        %v421 = vsel %vm420, %v413, %v417
        %v422 = vand.u32 2147483647, %v412
        %vm423 = vcmp.eq.f32.partialorder %v422, 8.507059e+37
        %v424 = vand.u32 %v412, 2147483648
        %v425 = vor.u32 1.1754944e-38, %v424
        %v426 = vsel %vm423, %v425, %v421
        %v427 = vmul.f32 1.0, %v426
        %v428 = vmul.f32 %v409, %v427
        %429 = vst.msk [vmem:[%s349] sm:$0xff] %vm403, %v428
        %v431 = vsel %vm403, %v428, 0
        %433 = vmatpush.msra.mxu0 0.0
        %434 = vmatpush.msra.mxu0 0.0
        %435 = vmatpush.msra.mxu0 0.0
        %436 = vmatpush.msra.mxu0 0.0
        %437 = vmatpush.msra.mxu0 0.0
        %438 = vmatpush.msra.mxu0 0.0
        %439 = vmatpush.msra.mxu0 0.0
        %440 = vmatpush.msra.mxu0 0.0
        %441 = vmatpush.msra.mxu0 0.0
        %442 = vmatpush.msra.mxu0 0.0
        %443 = vmatpush.msra.mxu0 0.0
        %444 = vmatpush.msra.mxu0 0.0
        %445 = vmatpush.msra.mxu0 0.0
        %446 = vmatpush.msra.mxu0 0.0
        %447 = vmatpush.msra.mxu0 0.0
        %448 = vmatpush.msra.mxu0 %v367
        %449 = vmatmul.f32.gmra.mxu0 %v431
        %v450 = vpop.f32.mrf.mxu0
        %v451 = vadd.f32 0.0, %v450
        %452 = vdwg.mxu0
        %453 = vst.msk [vmem:[%s342] sm:$0xff] %vm368, %v451
        %s454 = sand.u32 %s159, 1
        %s455 = scalar_lea.sflag [#allocation4], %s454
        %s456 = sand.u32 %s159, 1
        %s457 = smul.addr %s456, 8
        %s458 = scalar_lea.vmem [#allocation7], %s457
        %s459 = sand.u32 %s187, 1
        %s460 = scalar_lea.sflag [#allocation9], %s459
        %s461 = sand.u32 %s187, 1
        %s462 = smul.addr %s461, 8
        %s463 = scalar_lea.vmem [#allocation8], %s462
        // Predicated region
        $region45: #{_attention_full.1} parent=35 // pred_check
          %p464 = pneg %p169
        $region46: #{_attention_full.1} parent=35 // pred_check_branch
          %466 = sbr.rel (%p464) target = $region48
        $region47: #{_attention_full.1} parent=35 // pred_region
          %468 = vsyncadd %s455, 0
          %s469 = sadd.s32 %s34, %s33
          %s470 = smul.addr %s469, 8
          %s471 = scalar_lea.hbm %s4, %s470
          %s473 = sshll.u32 %s458, 4
          %s474 = int_to_ptr.vmem [resolvable:$true] %s473
          %s475 = sshll.u32 %s471, 4
          %s476 = int_to_ptr.hbm [resolvable:$true] %s475
          %478 = dma.vmem_to_hbm [thread:$0]  %s474, 128, %s476, %s455
        $region48: #{_attention_full.1} parent=35 // pred_fallthru
          _
        // Predicated region
        $region49: #{_attention_full.1} parent=35 // pred_check
          %p479 = pneg %p197
        $region50: #{_attention_full.1} parent=35 // pred_check_branch
          %481 = sbr.rel (%p479) target = $region52
        $region51: #{_attention_full.1} parent=35 // pred_region
          %483 = vsyncadd %s460, 0
          %s484 = sadd.s32 %s34, %s33
          %s485 = smul.addr %s484, 8
          %s486 = scalar_lea.hbm %s5, %s485
          %s488 = sshll.u32 %s463, 4
          %s489 = int_to_ptr.vmem [resolvable:$true] %s488
          %s490 = sshll.u32 %s486, 4
          %s491 = int_to_ptr.hbm [resolvable:$true] %s490
          %493 = dma.vmem_to_hbm [thread:$0]  %s489, 128, %s491, %s460
        $region52: #{_attention_full.1} parent=35 // pred_fallthru
          _
      $region36: #{_attention_full.1} parent=5 // pred_fallthru
        _
      %p494 = scmp.le.s32.totalorder 2, %s24
      // Predicated region
      $region53: #{_attention_full.1} parent=5 // pred_check
        %p495 = pneg %p494
      $region54: #{_attention_full.1} parent=5 // pred_check_branch
        %497 = sbr.rel (%p495) target = $region56
      $region55: #{_attention_full.1} parent=5 // pred_region
        %s498 = ssub.s32 %s24, 2
        // Predicated region
        $region57: #{_attention_full.1} parent=55 // pred_check
          %p499 = pneg %p175
        $region58: #{_attention_full.1} parent=55 // pred_check_branch
          %501 = sbr.rel (%p499) target = $region60
        $region59: #{_attention_full.1} parent=55 // pred_region
          %s502 = sand.u32 %s160, 1
          %s503 = scalar_lea.sflag [#allocation4], %s502
          %s504 = sand.u32 %s160, 1
          %s505 = smul.addr %s504, 8
          %s506 = scalar_lea.vmem [#allocation7], %s505
          %508 = dma.done %s503, 128
        $region60: #{_attention_full.1} parent=55 // pred_fallthru
          _
        // Predicated region
        $region61: #{_attention_full.1} parent=55 // pred_check
          %p509 = pneg %p203
        $region62: #{_attention_full.1} parent=55 // pred_check_branch
          %511 = sbr.rel (%p509) target = $region64
        $region63: #{_attention_full.1} parent=55 // pred_region
          %s512 = sand.u32 %s188, 1
          %s513 = scalar_lea.sflag [#allocation9], %s512
          %s514 = sand.u32 %s188, 1
          %s515 = smul.addr %s514, 8
          %s516 = scalar_lea.vmem [#allocation8], %s515
          %518 = dma.done %s513, 128
        $region64: #{_attention_full.1} parent=55 // pred_fallthru
          _
      $region56: #{_attention_full.1} parent=5 // pred_fallthru
        _
    $region6: #{_attention_full.1} parent=1 // loop_footer
      %s28 = sadd.s32 1, %s24
    $region7: #{_attention_full.1} parent=1 // loop_footer_branch
      %23 = sbr.rel target = $region3
    $region8: #{_attention_full.1} parent=1 // loop_exit
      _
    %519 = vsyncpa [#allocation3], 1
    %s520 = scalar_lea.sflag [#allocation3], 1
    %521 = vsyncpa %s520, 1
    %522 = vsyncpa [#allocation6], 1
    %s523 = scalar_lea.sflag [#allocation6], 1
    %524 = vsyncpa %s523, 1
    %525 = vsyncpa [#allocation4], 1
    %s526 = scalar_lea.sflag [#allocation4], 1
    %527 = vsyncpa %s526, 1
    %528 = vsyncpa [#allocation9], 1
    %s529 = scalar_lea.sflag [#allocation9], 1
    %530 = vsyncpa %s529, 1

</llo_original>
